<compile_context>
chip_gen: v6e
topology: v6e:2x2x1
jax: 0.10.0
libtpu: 0.0.40
codegen_flags: <defaults>
</compile_context>

<pallas_src>
import functools

import jax
import jax.numpy as jnp
from jax.experimental import pallas as pl
from jax.experimental.pallas import tpu as pltpu

GAMMA = 20.0
ALPHA = 0.99
SIZE_AVERAGE = True

# ~0.5M elements per logit stream per block (~2 MiB f32).  With double
# buffering of x0/x1 (f32/bf16) + int8 targets this stays well under the
# scoped-VMEM budget of every TPU generation.
_TARGET_BLOCK_ELEMS = 512 * 1024


def _focal_kernel(x0_ref, x1_ref, t_ref, o_ref, acc_ref, *,
                  gamma, alpha, H, tile_h, nh, total_work, wpc):
    """Binary focal loss on one (tile_h, W) row-block; per-core partial sums."""
    c = pl.program_id(0)
    j = pl.program_id(1)
    w = c * wpc + j                       # flattened (batch, row-block) work id

    @pl.when(j == 0)
    def _():
        acc_ref[...] = jnp.zeros_like(acc_ref)

    @pl.when(w < total_work)              # skip the (at most one) padded step
    def _():
        x0 = x0_ref[0, 0].astype(jnp.float32)   # class-0 logits, (tile_h, W)
        x1 = x1_ref[0, 0].astype(jnp.float32)   # class-1 logits, (tile_h, W)
        t_f = t_ref[0].astype(jnp.float32)      # targets in {0, 1}, (tile_h, W)

        # d = x_other - x_target without selects: sign = +1 (t=0) / -1 (t=1).
        sign = 1.0 - 2.0 * t_f
        d = (x1 - x0) * sign

        # Stable binary log-softmax, purely elementwise (VPU + EUP):
        #   logpt       = -softplus(d)  = -(max(d, 0)  + log(1 + exp(-|d|)))
        #   log(1 - pt) = -softplus(-d) = -(max(-d, 0) + log(1 + exp(-|d|)))
        e = jnp.log(1.0 + jnp.exp(-jnp.abs(d)))
        sp_pos = jnp.maximum(d, 0.0) + e        # = -logpt       >= 0
        sp_neg = jnp.maximum(-d, 0.0) + e       # = -log(1 - pt) >= 0

        # (1 - pt)^gamma = exp(-gamma * softplus(-d)); avoids pow(negative).
        focal = jnp.exp(jnp.float32(-gamma) * sp_neg)

        # alpha "gather" for the binary case, again without selects.
        at = jnp.float32(alpha) + jnp.float32(1.0 - 2.0 * alpha) * t_f

        loss = focal * at * sp_pos              # (tile_h, W)

        if H % tile_h != 0:
            # Ragged H tail: zero rows past the end (DMA fill is garbage there).
            hb = w % nh
            row = jax.lax.broadcasted_iota(jnp.int32, loss.shape, 0) + hb * tile_h
            loss = jnp.where(row < H, loss, 0.0)

        if tile_h % 8 == 0:
            # vreg-aligned partial reduce: pure VALU adds into the (8, W) acc.
            acc_ref[...] += loss.reshape(tile_h // 8, 8, loss.shape[1]).sum(axis=0)
        else:
            # tile_h == H and H % 8 != 0 (small-input fallback): sublane reduce.
            acc_ref[...] += jnp.sum(loss, axis=0, keepdims=True)

    @pl.when(j == pl.num_programs(1) - 1)
    def _():
        # One tiny reduce per core; broadcast into this core's output slab.
        o_ref[...] = jnp.sum(acc_ref[...]) * jnp.ones(o_ref.shape, jnp.float32)


def _choose_tile_h(H, W):
    rows = max(32, (_TARGET_BLOCK_ELEMS // max(W, 1)) // 32 * 32)
    # Either the full H (always a legal block dim for any dtype) or a multiple
    # of 32 (legal second-minor tile for both f32 logits and int8 targets).
    return H if rows >= H else rows


def focal_loss(logits_nchw, target, *, gamma=GAMMA, alpha=ALPHA,
               size_average=SIZE_AVERAGE):
    """logits_nchw: (B, 2, H, W) float; target: (B, H, W) integer in {0, 1}."""
    B, C, H, W = logits_nchw.shape
    if C != 2:
        raise ValueError("scalar alpha=[a, 1-a] focal loss requires C == 2")
    N = B * H * W

    # int8 targets: 1 B/elem of kernel HBM traffic instead of 4.  (Ideally the
    # caller already supplies int8/uint8 and this is a no-op.)
    t = target if target.dtype.itemsize == 1 else target.astype(jnp.int8)

    tile_h = _choose_tile_h(H, W)
    nh = pl.cdiv(H, tile_h)
    if B * nh < 2 and H >= 64:
        # Ensure at least two row-blocks exist so both v7x TensorCores get work.
        tile_h = max(32, ((H // 2) // 32) * 32)
        nh = pl.cdiv(H, tile_h)

    total_work = B * nh                   # flattened (batch, row-block) items
    n_par = 2 if total_work >= 2 else 1   # leading parallel axis (v7x: 2 TCs)
    wpc = pl.cdiv(total_work, n_par)
    padded = n_par * wpc != total_work    # at most one padded trailing step

    def _decode(c, j):
        w = c * wpc + j
        if padded:
            # Clamp the padded step onto the last real work item: block index
            # equals the previous step's, so no extra DMA; compute is skipped
            # in-kernel via the `w < total_work` guard.
            w = jnp.minimum(w, total_work - 1)
        if nh == 1:
            return w, 0
        return w // nh, w % nh

    def x0_map(c, j):
        b, hb = _decode(c, j)
        return (b, 0, hb, 0)

    def x1_map(c, j):
        b, hb = _decode(c, j)
        return (b, 1, hb, 0)

    def t_map(c, j):
        b, hb = _decode(c, j)
        return (b, hb, 0)

    acc_rows = 8 if tile_h % 8 == 0 else 1

    kernel = functools.partial(
        _focal_kernel, gamma=float(gamma), alpha=float(alpha), H=H,
        tile_h=tile_h, nh=nh, total_work=total_work, wpc=wpc)

    xbytes = jnp.dtype(logits_nchw.dtype).itemsize
    blk = tile_h * W
    vmem_need = 2 * (2 * blk * xbytes + blk) + acc_rows * W * 4 + 2 * 8 * 128 * 4
    vmem_limit = int(min(max(2 * vmem_need, 16 * 2 ** 20), 32 * 2 ** 20))

    out = pl.pallas_call(
        kernel,
        out_shape=jax.ShapeDtypeStruct((n_par, 8, 128), jnp.float32),
        grid_spec=pltpu.PrefetchScalarGridSpec(
            num_scalar_prefetch=0,
            grid=(n_par, wpc),
            in_specs=[
                pl.BlockSpec((1, 1, tile_h, W), x0_map),   # class-0 plane (same array)
                pl.BlockSpec((1, 1, tile_h, W), x1_map),   # class-1 plane (same array)
                pl.BlockSpec((1, tile_h, W), t_map),       # int8 targets
            ],
            out_specs=pl.BlockSpec((1, 8, 128), lambda c, j: (c, 0, 0)),
            scratch_shapes=[pltpu.VMEM((acc_rows, W), jnp.float32)],
        ),
        compiler_params=pltpu.CompilerParams(
            # TODO(synk): on v7x consider pltpu.CORE_PARALLEL on axis 0 to
            # guarantee the 2-TensorCore split; "parallel" is safe everywhere.
            dimension_semantics=("parallel", "arbitrary"),
            vmem_limit_bytes=vmem_limit),
    )(logits_nchw, logits_nchw, t)

    loss_sum = jnp.sum(out[:, 0, 0])
    return loss_sum / N if size_average else loss_sum


def focal_loss_ref(logits_nchw, target, *, gamma=GAMMA, alpha=ALPHA,
                   size_average=SIZE_AVERAGE):
    """Pure-JAX mirror of the PyTorch FocalLoss.forward."""
    B, C, H, W = logits_nchw.shape
    x = logits_nchw.reshape(B, C, H * W).transpose(0, 2, 1).reshape(-1, C)
    t = target.reshape(-1).astype(jnp.int32)
    logp = jax.nn.log_softmax(x.astype(jnp.float32), axis=1)
    logpt = jnp.take_along_axis(logp, t[:, None], axis=1)[:, 0]
    pt = jnp.exp(logpt)
    alpha_vec = jnp.array([alpha, 1.0 - alpha], dtype=jnp.float32)
    at = alpha_vec[t]
    loss = -1.0 * (1.0 - pt) ** gamma * (logpt * at)
    return loss.mean() if size_average else loss.sum()


if __name__ == "__main__":
    key = jax.random.PRNGKey(0)
    k1, k2 = jax.random.split(key)

    B, C, H, W = 2, 2, 16, 16   # binary classes, matching default alpha=[a, 1-a]
    logits = jax.random.normal(k1, (B, C, H, W), dtype=jnp.float32)
    target = jax.random.randint(k2, (B, H, W), 0, C, dtype=jnp.int32)

    out = focal_loss(logits, target)
    out = jax.block_until_ready(out)

    ref = focal_loss_ref(logits, target)
    assert jnp.allclose(out, ref, rtol=1e-4, atol=1e-8), (out, ref)

    print("KERNEL_OK")
</pallas_src>

<mosaic_0001>
module attributes {stable_mosaic.version = 11 : i64} {
  func.func @_focal_kernel(%arg0: i32, %arg1: i32, %arg2: memref<1x1x16x16xf32, #tpu.memory_space<vmem>>, %arg3: memref<1x1x16x16xf32, #tpu.memory_space<vmem>>, %arg4: memref<1x16x16xi8, #tpu.memory_space<vmem>>, %arg5: memref<1x8x128xf32, #tpu.memory_space<vmem>>, %arg6: memref<8x16xf32, #tpu.memory_space<vmem>>) attributes {dimension_semantics = [#tpu.dimension_semantics<parallel>, #tpu.dimension_semantics<arbitrary>], iteration_bounds = array<i64: 2, 1>, scalar_prefetch = 0 : i64, scratch_operands = 1 : i64, tpu.core_type = #tpu.core_type<tc>, window_params = [{transform_indices = @transform_0, window_bounds = array<i64: 1, 1, 16, 16>}, {transform_indices = @transform_1, window_bounds = array<i64: 1, 1, 16, 16>}, {transform_indices = @transform_2, window_bounds = array<i64: 1, 16, 16>}, {transform_indices = @transform_3, window_bounds = array<i64: 1, 8, 128>}]} {
    %c1_i32 = arith.constant 1 : i32
    %0 = arith.muli %arg0, %c1_i32 : i32
    %1 = arith.addi %0, %arg1 : i32
    %c0_i32 = arith.constant 0 : i32
    %2 = arith.cmpi eq, %arg1, %c0_i32 : i32
    %3 = arith.extui %2 : i1 to i32
    %c0_i32_0 = arith.constant 0 : i32
    %4 = arith.cmpi ne, %3, %c0_i32_0 : i32
    scf.if %4 {
      %cst = arith.constant 0.000000e+00 : f32
      %11 = vector.broadcast %cst : f32 to vector<8x16xf32>
      %c0 = arith.constant 0 : index
      %c0_4 = arith.constant 0 : index
      %12 = vector.load %arg6[%c0, %c0_4] : memref<8x16xf32, #tpu.memory_space<vmem>>, vector<8x16xf32>
      tpu.vector_store %arg6[%c0, %c0_4], %11 {strides = array<i32>} : memref<8x16xf32, #tpu.memory_space<vmem>>, vector<8x16xf32>,
    } else {
    }
    %c2_i32 = arith.constant 2 : i32
    %5 = arith.cmpi slt, %1, %c2_i32 : i32
    %6 = arith.extui %5 : i1 to i32
    %c0_i32_1 = arith.constant 0 : i32
    %7 = arith.cmpi ne, %6, %c0_i32_1 : i32
    scf.if %7 {
      %c0 = arith.constant 0 : index
      %c0_4 = arith.constant 0 : index
      %c0_5 = arith.constant 0 : index
      %c0_6 = arith.constant 0 : index
      %11 = vector.load %arg2[%c0, %c0_4, %c0_5, %c0_6] : memref<1x1x16x16xf32, #tpu.memory_space<vmem>>, vector<1x1x16x16xf32>
      %12 = vector.shape_cast %11 : vector<1x1x16x16xf32> to vector<16x16xf32>
      %c0_7 = arith.constant 0 : index
      %c0_8 = arith.constant 0 : index
      %c0_9 = arith.constant 0 : index
      %c0_10 = arith.constant 0 : index
      %13 = vector.load %arg3[%c0_7, %c0_8, %c0_9, %c0_10] : memref<1x1x16x16xf32, #tpu.memory_space<vmem>>, vector<1x1x16x16xf32>
      %14 = vector.shape_cast %13 : vector<1x1x16x16xf32> to vector<16x16xf32>
      %c0_11 = arith.constant 0 : index
      %c0_12 = arith.constant 0 : index
      %c0_13 = arith.constant 0 : index
      %15 = vector.load %arg4[%c0_11, %c0_12, %c0_13] : memref<1x16x16xi8, #tpu.memory_space<vmem>>, vector<1x16x16xi8>
      %16 = vector.shape_cast %15 : vector<1x16x16xi8> to vector<16x16xi8>
      %17 = arith.sitofp %16 : vector<16x16xi8> to vector<16x16xf32>
      %cst = arith.constant 2.000000e+00 : f32
      %18 = vector.broadcast %cst : f32 to vector<16x16xf32>
      %19 = arith.mulf %18, %17 : vector<16x16xf32>
      %cst_14 = arith.constant 1.000000e+00 : f32
      %20 = vector.broadcast %cst_14 : f32 to vector<16x16xf32>
      %21 = arith.subf %20, %19 : vector<16x16xf32>
      %22 = arith.subf %14, %12 : vector<16x16xf32>
      %23 = arith.mulf %22, %21 : vector<16x16xf32>
      %24 = math.absf %23 : vector<16x16xf32>
      %cst_15 = arith.constant 0.000000e+00 : f32
      %25 = vector.broadcast %cst_15 : f32 to vector<16x16xf32>
      %26 = arith.subf %25, %24 : vector<16x16xf32>
      %27 = math.exp %26 : vector<16x16xf32>
      %cst_16 = arith.constant 1.000000e+00 : f32
      %28 = vector.broadcast %cst_16 : f32 to vector<16x16xf32>
      %29 = arith.addf %28, %27 : vector<16x16xf32>
      %30 = math.log %29 : vector<16x16xf32>
      %cst_17 = arith.constant 0.000000e+00 : f32
      %31 = vector.broadcast %cst_17 : f32 to vector<16x16xf32>
      %32 = arith.maximumf %23, %31 : vector<16x16xf32>
      %33 = arith.addf %32, %30 : vector<16x16xf32>
      %cst_18 = arith.constant 0.000000e+00 : f32
      %34 = vector.broadcast %cst_18 : f32 to vector<16x16xf32>
      %35 = arith.subf %34, %23 : vector<16x16xf32>
      %cst_19 = arith.constant 0.000000e+00 : f32
      %36 = vector.broadcast %cst_19 : f32 to vector<16x16xf32>
      %37 = arith.maximumf %35, %36 : vector<16x16xf32>
      %38 = arith.addf %37, %30 : vector<16x16xf32>
      %cst_20 = arith.constant -2.000000e+01 : f32
      %39 = vector.broadcast %cst_20 : f32 to vector<16x16xf32>
      %40 = arith.mulf %39, %38 : vector<16x16xf32>
      %41 = math.exp %40 : vector<16x16xf32>
      %cst_21 = arith.constant -9.800000e-01 : f32
      %42 = vector.broadcast %cst_21 : f32 to vector<16x16xf32>
      %43 = arith.mulf %42, %17 : vector<16x16xf32>
      %cst_22 = arith.constant 9.900000e-01 : f32
      %44 = vector.broadcast %cst_22 : f32 to vector<16x16xf32>
      %45 = arith.addf %44, %43 : vector<16x16xf32>
      %46 = arith.mulf %41, %45 : vector<16x16xf32>
      %47 = arith.mulf %46, %33 : vector<16x16xf32>
      %c0_23 = arith.constant 0 : index
      %c0_24 = arith.constant 0 : index
      %48 = vector.load %arg6[%c0_23, %c0_24] : memref<8x16xf32, #tpu.memory_space<vmem>>, vector<8x16xf32>
      %49 = vector.shape_cast %47 : vector<16x16xf32> to vector<2x8x16xf32>
      %cst_25 = arith.constant dense<0.000000e+00> : vector<8x16xf32>
      %50 = vector.multi_reduction <add>, %49, %cst_25 [0] : vector<2x8x16xf32> to vector<8x16xf32>
      %51 = arith.addf %48, %50 : vector<8x16xf32>
      %c0_26 = arith.constant 0 : index
      %c0_27 = arith.constant 0 : index
      %52 = vector.load %arg6[%c0_26, %c0_27] : memref<8x16xf32, #tpu.memory_space<vmem>>, vector<8x16xf32>
      tpu.vector_store %arg6[%c0_26, %c0_27], %51 {strides = array<i32>} : memref<8x16xf32, #tpu.memory_space<vmem>>, vector<8x16xf32>,
    } else {
    }
    %c0_i32_2 = arith.constant 0 : i32
    %8 = arith.cmpi eq, %arg1, %c0_i32_2 : i32
    %9 = arith.extui %8 : i1 to i32
    %c0_i32_3 = arith.constant 0 : i32
    %10 = arith.cmpi ne, %9, %c0_i32_3 : i32
    scf.if %10 {
      %c0 = arith.constant 0 : index
      %c0_4 = arith.constant 0 : index
      %11 = vector.load %arg6[%c0, %c0_4] : memref<8x16xf32, #tpu.memory_space<vmem>>, vector<8x16xf32>
      %12 = vector.shape_cast %11 : vector<8x16xf32> to vector<1x8x16xf32>
      %cst = arith.constant dense<0.000000e+00> : vector<1xf32>
      %13 = vector.multi_reduction <add>, %12, %cst [1, 2] : vector<1x8x16xf32> to vector<1xf32>
      %14 = vector.shape_cast %13 : vector<1xf32> to vector<1x1x1xf32>
      %15 = vector.extract %14[0, 0, 0] : f32 from vector<1x1x1xf32>
      %cst_5 = arith.constant 1.000000e+00 : f32
      %16 = vector.broadcast %cst_5 : f32 to vector<1x8x128xf32>
      %17 = vector.broadcast %15 : f32 to vector<1x8x128xf32>
      %18 = arith.mulf %17, %16 : vector<1x8x128xf32>
      %c0_6 = arith.constant 0 : index
      %c0_7 = arith.constant 0 : index
      %c0_8 = arith.constant 0 : index
      %19 = vector.load %arg5[%c0_6, %c0_7, %c0_8] : memref<1x8x128xf32, #tpu.memory_space<vmem>>, vector<1x8x128xf32>
      tpu.vector_store %arg5[%c0_6, %c0_7, %c0_8], %18 {strides = array<i32>} : memref<1x8x128xf32, #tpu.memory_space<vmem>>, vector<1x8x128xf32>,
    } else {
    }
    return
  }
  func.func @transform_0(%arg0: i32, %arg1: i32) -> (i32, i32, i32, i32) {
    %c1_i32 = arith.constant 1 : i32
    %0 = arith.muli %arg0, %c1_i32 : i32
    %1 = arith.addi %0, %arg1 : i32
    %c0_i32 = arith.constant 0 : i32
    %c0_i32_0 = arith.constant 0 : i32
    %c0_i32_1 = arith.constant 0 : i32
    %c0_i32_2 = arith.constant 0 : i32
    return %1, %c0_i32, %c0_i32_0, %c0_i32_1 : i32, i32, i32, i32
  }
  func.func @transform_1(%arg0: i32, %arg1: i32) -> (i32, i32, i32, i32) {
    %c1_i32 = arith.constant 1 : i32
    %0 = arith.muli %arg0, %c1_i32 : i32
    %1 = arith.addi %0, %arg1 : i32
    %c1_i32_0 = arith.constant 1 : i32
    %c0_i32 = arith.constant 0 : i32
    %c0_i32_1 = arith.constant 0 : i32
    %c0_i32_2 = arith.constant 0 : i32
    return %1, %c1_i32_0, %c0_i32, %c0_i32_1 : i32, i32, i32, i32
  }
  func.func @transform_2(%arg0: i32, %arg1: i32) -> (i32, i32, i32) {
    %c1_i32 = arith.constant 1 : i32
    %0 = arith.muli %arg0, %c1_i32 : i32
    %1 = arith.addi %0, %arg1 : i32
    %c0_i32 = arith.constant 0 : i32
    %c0_i32_0 = arith.constant 0 : i32
    %c0_i32_1 = arith.constant 0 : i32
    return %1, %c0_i32, %c0_i32_0 : i32, i32, i32
  }
  func.func @transform_3(%arg0: i32, %arg1: i32) -> (i32, i32, i32) {
    %c0_i32 = arith.constant 0 : i32
    %c0_i32_0 = arith.constant 0 : i32
    %c0_i32_1 = arith.constant 0 : i32
    return %arg0, %c0_i32, %c0_i32_0 : i32, i32, i32
  }
}

</mosaic_0001>

<llo_original>
// kernel: tpu_custom_call.1
$region0: #{tpu_custom_call.1}
  #allocation0 [shape = 'u32[]', space=smem, size = 0x4, offset = 0x4, fixed_abs, tag = 'smem constant byte address 0x4 - core index']
  #allocation1 [shape = 'u32[144,128]{1,0:T(1,128)}', space=vmem, size = 0x12000, scoped, tag = 'internal scratch']
  #allocation2 [shape = 'f32[8,16]{1,0:T(8,128)}', space=vmem, size = 0x1000, scoped, tag = 'scratch operand']
  %s0 = inlined_call_operand.hbm [shape: f32[2,2,16,16], index: 0, kind: input, shape index: {}]
  %s1 = inlined_call_operand.hbm [shape: f32[2,2,16,16], index: 1, kind: input, shape index: {}]
  %s2 = inlined_call_operand.hbm [shape: s8[2,16,16], index: 2, kind: input, shape index: {}]
  %s3 = inlined_call_operand.hbm [shape: f32[2,8,128], index: 3, kind: output, shape index: {}]
  %s4 = sld [smem:[#allocation0]]
  $region69: #{tpu_custom_call.1} parent=0
    _
  %s6 = ssub.s32 1, %s4
  %s7 = scalar_select 0, %s6, %s4
  $region1: #{tpu_custom_call.1} parent=0
    #allocation3 [shape = 'u8[16384]{0}', space=vmem, size = 0x4000, scoped, tag = 'input window, operand 0']
    #allocation4 [shape = 's32[2]{0}', space=sflag, size = 0x8, scoped, tag = 'scoped memory for tpu_custom_call.1']
    #allocation5 [shape = 's32[2]{0}', space=sflag, size = 0x8, scoped, tag = 'scoped memory for tpu_custom_call.1']
    #allocation6 [shape = 'u8[16384]{0}', space=vmem, size = 0x4000, scoped, tag = 'input window, operand 1']
    #allocation7 [shape = 's32[2]{0}', space=sflag, size = 0x8, scoped, tag = 'scoped memory for tpu_custom_call.1']
    #allocation8 [shape = 'u8[4096]{0}', space=vmem, size = 0x1000, scoped, tag = 'input window, operand 2']
    #allocation9 [shape = 'u8[8192]{0}', space=vmem, size = 0x2000, scoped, tag = 'output window, operand 0']
    %8 = vsyncpa [#allocation4], 0
    %s9 = scalar_lea.sflag [#allocation4], 1
    %10 = vsyncpa %s9, 0
    %11 = vsyncpa [#allocation7], 0
    %s12 = scalar_lea.sflag [#allocation7], 1
    %13 = vsyncpa %s12, 0
    %14 = vsyncpa [#allocation5], 0
    %s15 = scalar_lea.sflag [#allocation5], 1
    %16 = vsyncpa %s15, 0
    loop: start=0, step=1, limit=4
    $region2: #{tpu_custom_call.1} parent=1 // loop_pre_header
      _
    $region3: #{tpu_custom_call.1} parent=1 // loop_header
      %s18 = sphi 0, %s22
      %p19 = scmp.ge.s32.totalorder %s18, 4
      %s25 = sphi 0, %s37
      %s26 = sphi 0, %s33
      %s27 = sphi 0, %s25
      %s28 = sphi 0, %s26
      %s29 = sphi 0, %s27
      %s30 = sphi 0, %s28
      %s42 = sphi 0, %s44
      %s45 = sphi 0, %s42
      %s46 = sphi 0, %s45
      %s62 = sphi 0, %s46
      %s70 = sphi 0, %s72
      %s73 = sphi 0, %s70
      %s74 = sphi 0, %s73
      %s90 = sphi 0, %s74
      %s98 = sphi 0, %s100
      %s101 = sphi 0, %s98
      %s102 = sphi 0, %s101
      %s118 = sphi 0, %s102
      %s124 = sphi 0, %s126
      %s127 = sphi 0, %s124
      %s128 = sphi 0, %s127
      %s144 = sphi 0, %s128
    $region4: #{tpu_custom_call.1} parent=1 // loop_header_branch
      %21 = sbr.rel (%p19) target = $region8
    $region5: #{tpu_custom_call.1} parent=1 // loop_body
      %s23 = ssub.s32 %s18, 1
      %s24 = ssub.s32 %s18, 2
      %s31 = sadd.s32 1, %s26
      %p32 = scmp.ge.s32.totalorder %s31, 1
      %s33 = scalar_select %p32, 0, %s31
      %s34 = sadd.s32 1, %s25
      %s35 = scalar_select %p32, %s34, %s25
      %p36 = scmp.ge.s32.totalorder %s35, 2
      %s37 = scalar_select %p36, 0, %s35
      %s38 = sadd.s32 %s25, %s26
      %s39 = sadd.s32 %s37, %s33
      %s40 = ssub.s32 %s38, %s39
      %p41 = scmp.eq.s32.totalorder %s40, 0
      %s43 = sadd.s32 %s42, 1
      %s44 = scalar_select %p41, %s42, %s43
      %p47 = pneg %p41
      %p48 = scmp.eq.s32.totalorder %s18, 1
      %p49 = por %p47, %p48
      %p50 = scmp.ne.s32.totalorder %s42, %s45
      %p51 = scmp.eq.s32.totalorder %s18, 0
      %p52 = por %p50, %p51
      %p53 = scmp.ne.s32.totalorder %s42, %s45
      %p54 = scmp.eq.s32.totalorder %s23, 1
      %p55 = por %p53, %p54
      %p56 = scmp.ne.s32.totalorder %s45, %s46
      %p57 = scmp.eq.s32.totalorder %s23, 0
      %p58 = por %p56, %p57
      %p59 = scmp.ne.s32.totalorder %s45, %s46
      %p60 = scmp.eq.s32.totalorder %s24, 1
      %p61 = por %p59, %p60
      %p63 = scmp.ne.s32.totalorder %s46, %s62
      %p64 = scmp.eq.s32.totalorder %s24, 0
      %p65 = por %p63, %p64
      %s66 = sadd.s32 %s25, %s26
      %s67 = sadd.s32 %s37, %s33
      %s68 = ssub.s32 %s66, %s67
      %p69 = scmp.eq.s32.totalorder %s68, 0
      %s71 = sadd.s32 %s70, 1
      %s72 = scalar_select %p69, %s70, %s71
      %p75 = pneg %p69
      %p76 = scmp.eq.s32.totalorder %s18, 1
      %p77 = por %p75, %p76
      %p78 = scmp.ne.s32.totalorder %s70, %s73
      %p79 = scmp.eq.s32.totalorder %s18, 0
      %p80 = por %p78, %p79
      %p81 = scmp.ne.s32.totalorder %s70, %s73
      %p82 = scmp.eq.s32.totalorder %s23, 1
      %p83 = por %p81, %p82
      %p84 = scmp.ne.s32.totalorder %s73, %s74
      %p85 = scmp.eq.s32.totalorder %s23, 0
      %p86 = por %p84, %p85
      %p87 = scmp.ne.s32.totalorder %s73, %s74
      %p88 = scmp.eq.s32.totalorder %s24, 1
      %p89 = por %p87, %p88
      %p91 = scmp.ne.s32.totalorder %s74, %s90
      %p92 = scmp.eq.s32.totalorder %s24, 0
      %p93 = por %p91, %p92
      %s94 = sadd.s32 %s25, %s26
      %s95 = sadd.s32 %s37, %s33
      %s96 = ssub.s32 %s94, %s95
      %p97 = scmp.eq.s32.totalorder %s96, 0
      %s99 = sadd.s32 %s98, 1
      %s100 = scalar_select %p97, %s98, %s99
      %p103 = pneg %p97
      %p104 = scmp.eq.s32.totalorder %s18, 1
      %p105 = por %p103, %p104
      %p106 = scmp.ne.s32.totalorder %s98, %s101
      %p107 = scmp.eq.s32.totalorder %s18, 0
      %p108 = por %p106, %p107
      %p109 = scmp.ne.s32.totalorder %s98, %s101
      %p110 = scmp.eq.s32.totalorder %s23, 1
      %p111 = por %p109, %p110
      %p112 = scmp.ne.s32.totalorder %s101, %s102
      %p113 = scmp.eq.s32.totalorder %s23, 0
      %p114 = por %p112, %p113
      %p115 = scmp.ne.s32.totalorder %s101, %s102
      %p116 = scmp.eq.s32.totalorder %s24, 1
      %p117 = por %p115, %p116
      %p119 = scmp.ne.s32.totalorder %s102, %s118
      %p120 = scmp.eq.s32.totalorder %s24, 0
      %p121 = por %p119, %p120
      %s122 = ssub.s32 %s25, %s37
      %p123 = scmp.eq.s32.totalorder %s122, 0
      %s125 = sadd.s32 %s124, 1
      %s126 = scalar_select %p123, %s124, %s125
      %p129 = pneg %p123
      %p130 = scmp.eq.s32.totalorder %s18, 1
      %p131 = por %p129, %p130
      %p132 = scmp.ne.s32.totalorder %s124, %s127
      %p133 = scmp.eq.s32.totalorder %s18, 0
      %p134 = por %p132, %p133
      %p135 = scmp.ne.s32.totalorder %s124, %s127
      %p136 = scmp.eq.s32.totalorder %s23, 1
      %p137 = por %p135, %p136
      %p138 = scmp.ne.s32.totalorder %s127, %s128
      %p139 = scmp.eq.s32.totalorder %s23, 0
      %p140 = por %p138, %p139
      %p141 = scmp.ne.s32.totalorder %s127, %s128
      %p142 = scmp.eq.s32.totalorder %s24, 1
      %p143 = por %p141, %p142
      %p145 = scmp.ne.s32.totalorder %s128, %s144
      %p146 = scmp.eq.s32.totalorder %s24, 0
      %p147 = por %p145, %p146
      %p148 = scmp.le.s32.totalorder 1, %s18
      %p149 = scmp.lt.s32.totalorder %s18, 3
      %p150 = pnand %p148, %p149
      %p151 = pneg %p150
      // Predicated region
      $region9: #{tpu_custom_call.1} parent=5 // pred_check
        _
      $region10: #{tpu_custom_call.1} parent=5 // pred_check_branch
        %153 = sbr.rel (%p150) target = $region12
      $region11: #{tpu_custom_call.1} parent=5 // pred_region
        %s154 = ssub.s32 %s18, 1
      $region12: #{tpu_custom_call.1} parent=5 // pred_fallthru
        _
      %p155 = scmp.lt.s32.totalorder %s18, 2
      // Predicated region
      $region13: #{tpu_custom_call.1} parent=5 // pred_check
        %p156 = pneg %p155
      $region14: #{tpu_custom_call.1} parent=5 // pred_check_branch
        %158 = sbr.rel (%p156) target = $region16
      $region15: #{tpu_custom_call.1} parent=5 // pred_region
        // Predicated region
        $region17: #{tpu_custom_call.1} parent=15 // pred_check
          %p159 = pneg %p52
        $region18: #{tpu_custom_call.1} parent=15 // pred_check_branch
          %161 = sbr.rel (%p159) target = $region20
        $region19: #{tpu_custom_call.1} parent=15 // pred_region
          %s162 = sand.u32 %s42, 1
          %s163 = scalar_lea.sflag [#allocation4], %s162
          %s164 = sand.u32 %s42, 1
          %s165 = smul.addr %s164, 16
          %s166 = scalar_lea.vmem [#allocation3], %s165
          %s167 = sadd.s32 %s25, %s26
          %s169 = ssub.s32 256, 256
          %170 = vsyncadd %s163, %s169
          %s171 = smul.addr %s167, 4
          %s172 = smul.addr %s171, 128
          %s173 = scalar_lea.hbm %s0, %s172
          %s174 = sshll.u32 %s166, 4
          %s175 = int_to_ptr.vmem [resolvable:$true] %s174
          %180 = dma.hbm_to_vmem [thread:$0]  %s173, 256, %s175, %s163, 128, 128, 8
        $region20: #{tpu_custom_call.1} parent=15 // pred_fallthru
          _
        // Predicated region
        $region21: #{tpu_custom_call.1} parent=15 // pred_check
          %p181 = pneg %p80
        $region22: #{tpu_custom_call.1} parent=15 // pred_check_branch
          %183 = sbr.rel (%p181) target = $region24
        $region23: #{tpu_custom_call.1} parent=15 // pred_region
          %s184 = sand.u32 %s18, 1
          %s185 = scalar_lea.sflag [#allocation7], %s184
          %s186 = sand.u32 %s70, 1
          %s187 = smul.addr %s186, 16
          %s188 = scalar_lea.vmem [#allocation6], %s187
          %s189 = sadd.s32 %s25, %s26
          %s191 = ssub.s32 256, 256
          %192 = vsyncadd %s185, %s191
          %s193 = smul.addr %s189, 4
          %s194 = sadd.s32 2, %s193
          %s195 = smul.addr %s194, 128
          %s196 = scalar_lea.hbm %s1, %s195
          %s197 = sshll.u32 %s188, 4
          %s198 = int_to_ptr.vmem [resolvable:$true] %s197
          %203 = dma.hbm_to_vmem [thread:$0]  %s196, 256, %s198, %s185, 128, 128, 8
        $region24: #{tpu_custom_call.1} parent=15 // pred_fallthru
          _
        // Predicated region
        $region25: #{tpu_custom_call.1} parent=15 // pred_check
          %p204 = pneg %p108
        $region26: #{tpu_custom_call.1} parent=15 // pred_check_branch
          %206 = sbr.rel (%p204) target = $region28
        $region27: #{tpu_custom_call.1} parent=15 // pred_region
          %s207 = sand.u32 %s18, 1
          %s208 = scalar_lea.sflag [#allocation7], %s207
          %s209 = sand.u32 %s98, 1
          %s210 = smul.addr %s209, 4
          %s211 = scalar_lea.vmem [#allocation8], %s210
          %s212 = sadd.s32 %s25, %s26
          %s214 = ssub.s32 64, 64
          %215 = vsyncadd %s208, %s214
          %s216 = smul.addr %s212, 2
          %s217 = smul.addr %s216, 32
          %s218 = scalar_lea.hbm %s2, %s217
          %s219 = sshll.u32 %s211, 4
          %s220 = int_to_ptr.vmem [resolvable:$true] %s219
          %225 = dma.hbm_to_vmem [thread:$0]  %s218, 64, %s220, %s208, 32, 32, 2
        $region28: #{tpu_custom_call.1} parent=15 // pred_fallthru
          _
      $region16: #{tpu_custom_call.1} parent=5 // pred_fallthru
        _
      %p226 = scmp.le.s32.totalorder 1, %s18
      %p227 = scmp.lt.s32.totalorder %s18, 3
      %p228 = pnand %p226, %p227
      %p229 = pneg %p228
      // Predicated region
      $region29: #{tpu_custom_call.1} parent=5 // pred_check
        _
      $region30: #{tpu_custom_call.1} parent=5 // pred_check_branch
        %231 = sbr.rel (%p228) target = $region32
      $region31: #{tpu_custom_call.1} parent=5 // pred_region
        %s232 = ssub.s32 %s18, 1
        %s233 = sand.u32 %s45, 1
        %s234 = scalar_lea.sflag [#allocation4], %s233
        %s235 = sand.u32 %s45, 1
        %s236 = smul.addr %s235, 16
        %s237 = scalar_lea.vmem [#allocation3], %s236
        // Predicated region
        $region33: #{tpu_custom_call.1} parent=31 // pred_check
          %p238 = pneg %p58
        $region34: #{tpu_custom_call.1} parent=31 // pred_check_branch
          %240 = sbr.rel (%p238) target = $region36
        $region35: #{tpu_custom_call.1} parent=31 // pred_region
          %241 = dma.done %s234, 256
        $region36: #{tpu_custom_call.1} parent=31 // pred_fallthru
          _
        %s242 = sand.u32 %s23, 1
        %s243 = scalar_lea.sflag [#allocation7], %s242
        %s244 = sand.u32 %s73, 1
        %s245 = smul.addr %s244, 16
        %s246 = scalar_lea.vmem [#allocation6], %s245
        // Predicated region
        $region37: #{tpu_custom_call.1} parent=31 // pred_check
          %p247 = pneg %p86
        $region38: #{tpu_custom_call.1} parent=31 // pred_check_branch
          %249 = sbr.rel (%p247) target = $region40
        $region39: #{tpu_custom_call.1} parent=31 // pred_region
          %250 = dma.done %s243, 256
        $region40: #{tpu_custom_call.1} parent=31 // pred_fallthru
          _
        %s251 = sand.u32 %s23, 1
        %s252 = scalar_lea.sflag [#allocation7], %s251
        %s253 = sand.u32 %s101, 1
        %s254 = smul.addr %s253, 4
        %s255 = scalar_lea.vmem [#allocation8], %s254
        // Predicated region
        $region41: #{tpu_custom_call.1} parent=31 // pred_check
          %p256 = pneg %p114
        $region42: #{tpu_custom_call.1} parent=31 // pred_check_branch
          %258 = sbr.rel (%p256) target = $region44
        $region43: #{tpu_custom_call.1} parent=31 // pred_region
          %259 = dma.done %s252, 64
        $region44: #{tpu_custom_call.1} parent=31 // pred_fallthru
          _
        %s260 = sand.u32 %s45, 1
        %s261 = scalar_lea.sflag [#allocation4], %s260
        %s262 = sand.u32 %s45, 1
        %s263 = smul.addr %s262, 16
        %s264 = scalar_lea.vmem [#allocation3], %s263
        %p265 = pneg %p58
        %p266 = pneg %p55
        %s267 = sand.u32 %s23, 1
        %s268 = scalar_lea.sflag [#allocation7], %s267
        %s269 = sand.u32 %s73, 1
        %s270 = smul.addr %s269, 16
        %s271 = scalar_lea.vmem [#allocation6], %s270
        %p272 = pneg %p86
        %p273 = pneg %p83
        %s274 = sand.u32 %s23, 1
        %s275 = scalar_lea.sflag [#allocation7], %s274
        %s276 = sand.u32 %s101, 1
        %s277 = smul.addr %s276, 4
        %s278 = scalar_lea.vmem [#allocation8], %s277
        %p279 = pneg %p114
        %p280 = pneg %p111
        %p281 = pneg %p140
        %p282 = pneg %p137
        %s283 = sand.u32 %s127, 1
        %s284 = scalar_lea.sflag [#allocation5], %s283
        %s285 = sand.u32 %s127, 1
        %s286 = smul.addr %s285, 8
        %s287 = scalar_lea.vmem [#allocation9], %s286
        %s288 = sadd.s32 %s27, %s28
        %s289 = sadd.s32 %s27, %s28
        %s290 = sadd.s32 %s27, %s28
        %s291 = sadd.s32 %s27, %s28
        %p292 = scmp.eq.s32.totalorder %s28, 0
        // Predicated region
        $region45: #{tpu_custom_call.1} parent=31 // pred_check
          %p293 = pneg %p292
        $region46: #{tpu_custom_call.1} parent=31 // pred_check_branch
          %295 = sbr.rel (%p293) target = $region48
        $region47: #{tpu_custom_call.1} parent=31 // pred_region
          %vm296 = vcmask 130048
          %297 = vst.msk [vmem:[#allocation2] sm:$0xff] %vm296, 0.0
        $region48: #{tpu_custom_call.1} parent=31 // pred_fallthru
          _
        %p298 = scmp.lt.s32.totalorder %s291, 2
        // Predicated region
        $region49: #{tpu_custom_call.1} parent=31 // pred_check
          %p299 = pneg %p298
        $region50: #{tpu_custom_call.1} parent=31 // pred_check_branch
          %301 = sbr.rel (%p299) target = $region52
        $region51: #{tpu_custom_call.1} parent=31 // pred_region
          %v302 = vld [vmem:[%s237] sm:$0xff]
          %v303 = vld [vmem:[%s237 + $0x8] sm:$0xff]
          %v304 = vld [vmem:[%s246] sm:$0xff]
          %v305 = vld [vmem:[%s246 + $0x8] sm:$0xff]
          %v306 = vld [vmem:[%s255] sm:$0x3]
          %v307 = vld [vmem:[%s255 + $0x2] sm:$0x3]
          %v308 = vunpack.c.0.s8 %v306
          %v309 = vunpack.c.0.s8 %v307
          %v310 = vcvt.s32.f32 %v308
          %v311 = vcvt.s32.f32 %v309
          %v312 = vmul.f32 %v310, 2.0
          %v313 = vmul.f32 %v311, 2.0
          %v314 = vsub.f32 1.0, %v312
          %v315 = vsub.f32 1.0, %v313
          %v316 = vsub.f32 %v304, %v302
          %v317 = vsub.f32 %v305, %v303
          %v318 = vmul.f32 %v316, %v314
          %v319 = vmul.f32 %v317, %v315
          %v320 = vand.u32 2147483647, %v318
          %v321 = vand.u32 2147483647, %v319
          %v322 = vsub.f32 0.0, %v320
          %v323 = vsub.f32 0.0, %v321
          %v324 = vmul.f32 %v322, 1.442695
          %v325 = vpow.pop %v324
          %v326 = vmul.f32 %v323, 1.442695
          %v327 = vpow.pop %v326
          %v328 = vadd.f32 %v325, 1.0
          %v329 = vadd.f32 %v327, 1.0
          %v330 = vlog2.pop %v328
          %v331 = vmul.f32 %v330, 0.6931472
          %v332 = vlog2.pop %v329
          %v333 = vmul.f32 %v332, 0.6931472
          %v334 = vmax.f32 %v318, 0.0
          %v335 = vmax.f32 %v319, 0.0
          %v336 = vadd.f32 %v334, %v331
          %v337 = vadd.f32 %v335, %v333
          %v338 = vsub.f32 0.0, %v318
          %v339 = vsub.f32 0.0, %v319
          %v340 = vmax.f32 %v338, 0.0
          %v341 = vmax.f32 %v339, 0.0
          %v342 = vadd.f32 %v340, %v331
          %v343 = vadd.f32 %v341, %v333
          %v344 = vmul.f32 %v342, -20.0
          %v345 = vmul.f32 %v343, -20.0
          %v346 = vmul.f32 %v344, 1.442695
          %v347 = vpow.pop %v346
          %v348 = vmul.f32 %v345, 1.442695
          %v349 = vpow.pop %v348
          %v350 = vmul.f32 %v310, -0.98
          %v351 = vmul.f32 %v311, -0.98
          %v352 = vadd.f32 %v350, 0.99
          %v353 = vadd.f32 %v351, 0.99
          %v354 = vmul.f32 %v347, %v352
          %v355 = vmul.f32 %v349, %v353
          %v356 = vmul.f32 %v354, %v336
          %v357 = vmul.f32 %v355, %v337
          %v358 = vld [vmem:[#allocation2] sm:$0xff]
          %vm359 = vcmask 130048
          %v360 = vsel %vm359, %v356, 0.0
          %v361 = vsel %vm359, %v357, 0.0
          %v362 = vadd.f32 %v360, %v361
          %v363 = vadd.f32 %v358, %v362
          %364 = vst.msk [vmem:[#allocation2] sm:$0xff] %vm359, %v363
        $region52: #{tpu_custom_call.1} parent=31 // pred_fallthru
          _
        // Predicated region
        $region53: #{tpu_custom_call.1} parent=31 // pred_check
          %p365 = pneg %p292
        $region54: #{tpu_custom_call.1} parent=31 // pred_check_branch
          %367 = sbr.rel (%p365) target = $region56
        $region55: #{tpu_custom_call.1} parent=31 // pred_region
          %v368 = vld [vmem:[#allocation2] sm:$0xff]
          %vm369 = vcmask 130048
          %v370 = vsel %vm369, %v368, 0.0
          %371 = vadd.xlane.f32.xlu0 %v370
          %v372 = vpop.xlane.xlu0 %371
          %v373 = vrot.slane %v372, 4
          %v374 = vadd.f32 %v372, %v373
          %v375 = vrot.slane %v374, 2
          %v376 = vadd.f32 %v374, %v375
          %v377 = vrot.slane %v376, 1
          %v378 = vadd.f32 %v376, %v377
          %s379 = vtos %v378
          %v380 = vstv %s379
          %381 = vst [vmem:[%s287] sm:$0xff] %v380
        $region56: #{tpu_custom_call.1} parent=31 // pred_fallthru
          _
        %s382 = sand.u32 %s127, 1
        %s383 = scalar_lea.sflag [#allocation5], %s382
        %s384 = sand.u32 %s127, 1
        %s385 = smul.addr %s384, 8
        %s386 = scalar_lea.vmem [#allocation9], %s385
        // Predicated region
        $region57: #{tpu_custom_call.1} parent=31 // pred_check
          %p387 = pneg %p137
        $region58: #{tpu_custom_call.1} parent=31 // pred_check_branch
          %389 = sbr.rel (%p387) target = $region60
        $region59: #{tpu_custom_call.1} parent=31 // pred_region
          %s391 = ssub.s32 128, 128
          %392 = vsyncadd %s383, %s391
          %s393 = smul.addr %s27, 128
          %s394 = scalar_lea.hbm %s3, %s393
          %s396 = sshll.u32 %s386, 4
          %s397 = int_to_ptr.vmem [resolvable:$true] %s396
          %399 = dma.vmem_to_hbm [thread:$0]  %s397, 128, %s394, %s383
        $region60: #{tpu_custom_call.1} parent=31 // pred_fallthru
          _
      $region32: #{tpu_custom_call.1} parent=5 // pred_fallthru
        _
      %p400 = scmp.le.s32.totalorder 2, %s18
      // Predicated region
      $region61: #{tpu_custom_call.1} parent=5 // pred_check
        %p401 = pneg %p400
      $region62: #{tpu_custom_call.1} parent=5 // pred_check_branch
        %403 = sbr.rel (%p401) target = $region64
      $region63: #{tpu_custom_call.1} parent=5 // pred_region
        %s404 = ssub.s32 %s18, 2
        // Predicated region
        $region65: #{tpu_custom_call.1} parent=63 // pred_check
          %p405 = pneg %p143
        $region66: #{tpu_custom_call.1} parent=63 // pred_check_branch
          %407 = sbr.rel (%p405) target = $region68
        $region67: #{tpu_custom_call.1} parent=63 // pred_region
          %s408 = sand.u32 %s128, 1
          %s409 = scalar_lea.sflag [#allocation5], %s408
          %s410 = sand.u32 %s128, 1
          %s411 = smul.addr %s410, 8
          %s412 = scalar_lea.vmem [#allocation9], %s411
          %413 = dma.done %s409, 128
        $region68: #{tpu_custom_call.1} parent=63 // pred_fallthru
          _
      $region64: #{tpu_custom_call.1} parent=5 // pred_fallthru
        _
    $region6: #{tpu_custom_call.1} parent=1 // loop_footer
      %s22 = sadd.s32 1, %s18
    $region7: #{tpu_custom_call.1} parent=1 // loop_footer_branch
      %17 = sbr.rel target = $region3
    $region8: #{tpu_custom_call.1} parent=1 // loop_exit
      _
    %414 = vsyncpa [#allocation4], 1
    %s415 = scalar_lea.sflag [#allocation4], 1
    %416 = vsyncpa %s415, 1
    %417 = vsyncpa [#allocation7], 1
    %s418 = scalar_lea.sflag [#allocation7], 1
    %419 = vsyncpa %s418, 1
    %420 = vsyncpa [#allocation5], 1
    %s421 = scalar_lea.sflag [#allocation5], 1
    %422 = vsyncpa %s421, 1

</llo_original>
